<compile_context>
chip_gen: v6e
topology: v6e:2x2x1
jax: 0.10.0
libtpu: 0.0.40
codegen_flags: <defaults>
</compile_context>

<pallas_src>
import functools
import math

import jax
import jax.numpy as jnp
from jax.experimental import pallas as pl
from jax.experimental.pallas import tpu as pltpu


# ----------------------------------------------------------------------------
# Kernels
# ----------------------------------------------------------------------------
def latent_posterior_kernel(
    xcat_ref, eps_ref,
    w1_ref, b1_ref,      # [2H, 4L], [1, 4L]
    w2_ref, b2_ref,      # [4L, 4L], [1, 4L]   (block-diagonal)
    w3_ref, b3_ref,      # [4L, 4L], [1, 4L]   (block-diagonal, cols = mp|lp|mq|lq)
    z_ref, kld_ref,
    *, latent_dim: int,
):
    f32 = jnp.float32
    mxu = w2_ref.dtype
    L = latent_dim

    # --- layer 1: single [TB,2H] @ [2H,4L] dot for both branches -------------
    h = jnp.dot(xcat_ref[...], w1_ref[...], preferred_element_type=f32)
    h = jnp.maximum(h + b1_ref[...], 0.0).astype(mxu)

    # --- layer 2: single block-diagonal [4L,4L] dot ---------------------------
    h = jnp.dot(h, w2_ref[...], preferred_element_type=f32)
    h = jnp.maximum(h + b2_ref[...], 0.0).astype(mxu)

    # --- layer 3: single fused [4L,4L] dot; static 32-lane column slices ------
    out3 = jnp.dot(h, w3_ref[...], preferred_element_type=f32) + b3_ref[...]
    mean_p = out3[:, 0 * L:1 * L]
    logv_p = out3[:, 1 * L:2 * L]
    mean_q = out3[:, 2 * L:3 * L]
    logv_q = out3[:, 3 * L:4 * L]

    # --- gaussian KLD + reparam (f32 VPU/EUP; 2 exp per element, not 3) ------
    inv_e_lp = jnp.exp(-logv_p)
    s_q = jnp.exp(0.5 * logv_q)              # reused: s_q*s_q == exp(logv_q)
    terms = (1.0 + (logv_q - logv_p)
             - (mean_p - mean_q) ** 2 * inv_e_lp
             - (s_q * s_q) * inv_e_lp)
    # Per-row KLD; padded rows of a ragged last tile are dropped by the masked
    # output writeback, so the wrapper's sum/B stays unbiased.
    kld_ref[...] = -0.5 * jnp.sum(terms, axis=-1, keepdims=True)

    z_ref[...] = (eps_ref[...] * s_q + mean_q).astype(z_ref.dtype)


def latent_prior_kernel(
    x_ref, eps_ref,
    w1_ref, b1_ref, w2_ref, b2_ref, w3_ref, b3_ref,
    z_ref,
    *, latent_dim: int,
):
    f32 = jnp.float32
    mxu = w2_ref.dtype
    L = latent_dim
    h = jnp.dot(x_ref[...], w1_ref[...], preferred_element_type=f32)
    h = jnp.maximum(h + b1_ref[...], 0.0).astype(mxu)
    h = jnp.dot(h, w2_ref[...], preferred_element_type=f32)
    h = jnp.maximum(h + b2_ref[...], 0.0).astype(mxu)
    out3 = jnp.dot(h, w3_ref[...], preferred_element_type=f32) + b3_ref[...]
    mean_p = out3[:, :L]
    logv_p = out3[:, L:]
    # PyTorch module: std = exp(1 * logvar_prior) * 1.5 (intentionally
    # asymmetric w.r.t. the posterior path — matches the reference code).
    z_ref[...] = (eps_ref[...] * (jnp.exp(logv_p) * 1.5) + mean_p).astype(z_ref.dtype)


# ----------------------------------------------------------------------------
# Wrapper-side parameter fusion (done once, outside the kernel)
# ----------------------------------------------------------------------------
def fuse_latent_params(prior_params, post_params, mxu_dtype=jnp.bfloat16):
    """Refactor raw per-layer (W[in,out], b[1,out]) params into the fused,
    MXU-friendly layout the kernels consume.  Biases stay f32; MXU operands
    are cast to `mxu_dtype` (bf16 by default)."""
    w1p, b1p, w2p, b2p, w3p, b3p = prior_params
    w1q, b1q, w2q, b2q, w3q, b3q = post_params
    H = w1p.shape[0]
    L2 = w3p.shape[1]            # 2 * latent_dim

    zH = jnp.zeros((H, L2), jnp.float32)
    zB = jnp.zeros((L2, L2), jnp.float32)

    # layer 1: h1 = cat(x_p, x) @ [[0 | W1q_top], [W1p | W1q_bot]] + [b1p | b1q]
    #   prior cols use only the x half (rows H:2H), posterior cols use W1q as-is.
    w1 = jnp.concatenate(
        [jnp.concatenate([zH, w1p], axis=0), w1q], axis=1)   # [2H, 4L]
    b1 = jnp.concatenate([b1p, b1q], axis=1)                 # [1, 4L]

    # layer 2: block-diagonal [4L, 4L]
    w2 = jnp.block([[w2p, zB], [zB, w2q]])
    b2 = jnp.concatenate([b2p, b2q], axis=1)

    # layer 3: block-diagonal [4L, 4L]; output cols = [mean_p|logv_p|mean_q|logv_q]
    w3 = jnp.block([[w3p, zB], [zB, w3q]])
    b3 = jnp.concatenate([b3p, b3q], axis=1)

    cast = lambda w: w.astype(mxu_dtype)
    return dict(
        # fused prior+posterior path (8 refs total incl. xcat/eps)
        w1=cast(w1), b1=b1, w2=cast(w2), b2=b2, w3=cast(w3), b3=b3,
        # prior-only path (x_p is None)
        p_w1=cast(w1p), p_b1=b1p, p_w2=cast(w2p), p_b2=b2p,
        p_w3=cast(w3p), p_b3=b3p,
    )


# ----------------------------------------------------------------------------
# Forward wrapper
# ----------------------------------------------------------------------------
def latent_forward(x, x_p, eps, fused):
    """Pallas implementation of Latent.forward.

    x:   [B, hidden_dim], x_p: [B, hidden_dim] or None, eps: [B, latent_dim]
    fused: output of fuse_latent_params(...).
    Returns (z [B, latent_dim] f32, kld_loss scalar).
    """
    B, L = eps.shape
    H = x.shape[1]
    mxu_dtype = fused["w1"].dtype

    # Batch tiling: TB capped at 256 rows (fills MXU M dim on v6e/v7x, keeps
    # per-step overhead amortized, and gives >= 2 grid tiles — both v7x TCs —
    # whenever B > 256).  Weights stay VMEM-resident via constant index_maps.
    TB = B if B <= 256 else 256
    n_tiles = pl.cdiv(B, TB)

    epsf = eps.astype(jnp.float32)

    def row_spec(d):
        return pl.BlockSpec((TB, d), lambda i: (i, 0))

    def full_spec(a):
        nd = a.ndim
        return pl.BlockSpec(a.shape, lambda i: (0,) * nd)

    if x_p is None:
        names = ("p_w1", "p_b1", "p_w2", "p_b2", "p_w3", "p_b3")
        params = [fused[n] for n in names]
        kernel = functools.partial(latent_prior_kernel, latent_dim=L)
        z = pl.pallas_call(
            kernel,
            grid=(n_tiles,),
            in_specs=[row_spec(H), row_spec(L)] + [full_spec(p) for p in params],
            out_specs=row_spec(L),
            out_shape=jax.ShapeDtypeStruct((B, L), jnp.float32),
            compiler_params=pltpu.CompilerParams(
                dimension_semantics=("parallel",)),
        )(x.astype(mxu_dtype), epsf, *params)
        return z, jnp.float32(0.0)

    # Concatenate wrapper-side (one cheap XLA copy, same as the PyTorch ref);
    # the kernel then needs a single [TB, 2H] activation input.
    xcat = jnp.concatenate([x_p.astype(mxu_dtype), x.astype(mxu_dtype)], axis=-1)

    names = ("w1", "b1", "w2", "b2", "w3", "b3")
    params = [fused[n] for n in names]
    kernel = functools.partial(latent_posterior_kernel, latent_dim=L)

    z, kld_rows = pl.pallas_call(
        kernel,
        grid=(n_tiles,),
        in_specs=[row_spec(2 * H), row_spec(L)] + [full_spec(p) for p in params],
        out_specs=(
            row_spec(L),
            # per-row KLD: (TB,1) block over a (B,1) array — legal for any B
            # (sublane dim is full-extent or a multiple of 8), race-free under
            # the "parallel" batch axis, padded rows dropped by masked store.
            pl.BlockSpec((TB, 1), lambda i: (i, 0)),
        ),
        out_shape=(
            jax.ShapeDtypeStruct((B, L), jnp.float32),
            jax.ShapeDtypeStruct((B, 1), jnp.float32),
        ),
        compiler_params=pltpu.CompilerParams(
            dimension_semantics=("parallel",)),
    )(xcat, epsf, *params)

    kld_loss = jnp.sum(kld_rows) / B
    return z, kld_loss


# ----------------------------------------------------------------------------
# Deterministic parameter init (mimics nn.Linear + the module's bias init)
# ----------------------------------------------------------------------------
def _init_linear(key, fan_in, fan_out):
    kw, kb = jax.random.split(key)
    bound = 1.0 / math.sqrt(fan_in)
    w = jax.random.uniform(kw, (fan_in, fan_out), jnp.float32, -bound, bound)
    stdv = 1.0 / math.sqrt(5)                       # weights_init: U(0, 2*stdv)
    b = jax.random.uniform(kb, (1, fan_out), jnp.float32, 0.0, 2.0 * stdv)
    return w, b


def init_latent_params(key, hidden_dim, latent_dim):
    keys = jax.random.split(key, 6)
    w1p, b1p = _init_linear(keys[0], hidden_dim, 2 * latent_dim)
    w2p, b2p = _init_linear(keys[1], 2 * latent_dim, 2 * latent_dim)
    w3p, b3p = _init_linear(keys[2], 2 * latent_dim, 2 * latent_dim)
    w1q, b1q = _init_linear(keys[3], 2 * hidden_dim, 2 * latent_dim)
    w2q, b2q = _init_linear(keys[4], 2 * latent_dim, 2 * latent_dim)
    w3q, b3q = _init_linear(keys[5], 2 * latent_dim, 2 * latent_dim)
    return (w1p, b1p, w2p, b2p, w3p, b3p), (w1q, b1q, w2q, b2q, w3q, b3q)


# ----------------------------------------------------------------------------
# Pure-JAX reference (mirrors the kernel's bf16 MXU-operand rounding)
# ----------------------------------------------------------------------------
def _ref_forward(x, x_p, eps, prior_params, post_params, latent_dim, mxu_dtype):
    f32 = jnp.float32
    r = lambda a: a.astype(mxu_dtype).astype(f32)

    def layer(h, w, b):
        return jnp.dot(r(h), r(w), preferred_element_type=f32) + b

    w1p, b1p, w2p, b2p, w3p, b3p = prior_params
    h = jnp.maximum(layer(x, w1p, b1p), 0.0)
    h = jnp.maximum(layer(h, w2p, b2p), 0.0)
    prior = layer(h, w3p, b3p)
    mean_p, logv_p = prior[:, :latent_dim], prior[:, latent_dim:]

    if x_p is None:
        return eps * (jnp.exp(logv_p) * 1.5) + mean_p, jnp.float32(0.0)

    w1q, b1q, w2q, b2q, w3q, b3q = post_params
    xx = jnp.concatenate([x_p, x], axis=-1)
    h = jnp.maximum(layer(xx, w1q, b1q), 0.0)
    h = jnp.maximum(layer(h, w2q, b2q), 0.0)
    post = layer(h, w3q, b3q)
    mean_q, logv_q = post[:, :latent_dim], post[:, latent_dim:]
    kld = -0.5 * jnp.sum(
        1.0 + (logv_q - logv_p)
        - (mean_p - mean_q) ** 2 / jnp.exp(logv_p)
        - jnp.exp(logv_q) / jnp.exp(logv_p),
        axis=-1,
    )
    z = eps * jnp.exp(0.5 * logv_q) + mean_q
    return z, jnp.mean(kld)


# ----------------------------------------------------------------------------
if __name__ == "__main__":
    B, hidden_dim, latent_dim = 8, 32, 32

    key = jax.random.PRNGKey(0)
    k_x, k_xp, k_eps, k_params = jax.random.split(key, 4)

    x = jax.random.normal(k_x, (B, hidden_dim), jnp.float32)
    x_p = jax.random.normal(k_xp, (B, hidden_dim), jnp.float32)
    eps = jax.random.normal(k_eps, (B, latent_dim), jnp.float32)  # torch.randn draw

    prior_params, post_params = init_latent_params(k_params, hidden_dim, latent_dim)
    fused = fuse_latent_params(prior_params, post_params, mxu_dtype=jnp.bfloat16)

    # posterior path (x_p given)
    z, kld_loss = latent_forward(x, x_p, eps, fused)
    jax.block_until_ready((z, kld_loss))

    z_ref, kld_ref_val = _ref_forward(
        x, x_p, eps, prior_params, post_params, latent_dim, jnp.bfloat16)
    assert jnp.allclose(z, z_ref, atol=2e-3, rtol=2e-3)
    assert jnp.allclose(kld_loss, kld_ref_val, atol=2e-3, rtol=2e-3)

    # prior-only path (x_p is None)
    z_prior, kld0 = latent_forward(x, None, eps, fused)
    jax.block_until_ready((z_prior, kld0))
    zp_ref, _ = _ref_forward(
        x, None, eps, prior_params, post_params, latent_dim, jnp.bfloat16)
    assert jnp.allclose(z_prior, zp_ref, atol=2e-3, rtol=2e-3)
    assert float(kld0) == 0.0

    print("KERNEL_OK")
</pallas_src>

<mosaic_0001>
module attributes {stable_mosaic.version = 11 : i64} {
  func.func @latent_posterior_kernel(%arg0: i32, %arg1: memref<8x64xbf16, #tpu.memory_space<vmem>>, %arg2: memref<8x32xf32, #tpu.memory_space<vmem>>, %arg3: memref<64x128xbf16, #tpu.memory_space<vmem>>, %arg4: memref<1x128xf32, #tpu.memory_space<vmem>>, %arg5: memref<128x128xbf16, #tpu.memory_space<vmem>>, %arg6: memref<1x128xf32, #tpu.memory_space<vmem>>, %arg7: memref<128x128xbf16, #tpu.memory_space<vmem>>, %arg8: memref<1x128xf32, #tpu.memory_space<vmem>>, %arg9: memref<8x32xf32, #tpu.memory_space<vmem>>, %arg10: memref<8x1xf32, #tpu.memory_space<vmem>>) attributes {dimension_semantics = [#tpu.dimension_semantics<parallel>], iteration_bounds = array<i64: 1>, scalar_prefetch = 0 : i64, scratch_operands = 0 : i64, tpu.core_type = #tpu.core_type<tc>, window_params = [{transform_indices = @transform_0, window_bounds = array<i64: 8, 64>}, {transform_indices = @transform_1, window_bounds = array<i64: 8, 32>}, {pipeline_mode = #tpu.pipeline_mode<synchronous>, transform_indices = @transform_2, window_bounds = array<i64: 64, 128>}, {pipeline_mode = #tpu.pipeline_mode<synchronous>, transform_indices = @transform_3, window_bounds = array<i64: 1, 128>}, {pipeline_mode = #tpu.pipeline_mode<synchronous>, transform_indices = @transform_4, window_bounds = array<i64: 128, 128>}, {pipeline_mode = #tpu.pipeline_mode<synchronous>, transform_indices = @transform_5, window_bounds = array<i64: 1, 128>}, {pipeline_mode = #tpu.pipeline_mode<synchronous>, transform_indices = @transform_6, window_bounds = array<i64: 128, 128>}, {pipeline_mode = #tpu.pipeline_mode<synchronous>, transform_indices = @transform_7, window_bounds = array<i64: 1, 128>}, {transform_indices = @transform_8, window_bounds = array<i64: 8, 32>}, {transform_indices = @transform_9, window_bounds = array<i64: 8, 1>}]} {
    %c0 = arith.constant 0 : index
    %c0_0 = arith.constant 0 : index
    %0 = vector.load %arg1[%c0, %c0_0] : memref<8x64xbf16, #tpu.memory_space<vmem>>, vector<8x64xbf16>
    %c0_1 = arith.constant 0 : index
    %c0_2 = arith.constant 0 : index
    %1 = vector.load %arg3[%c0_1, %c0_2] : memref<64x128xbf16, #tpu.memory_space<vmem>>, vector<64x128xbf16>
    %cst = arith.constant dense<0.000000e+00> : vector<8x128xf32>
    %2 = tpu.matmul %0, %1, %cst {dimension_numbers = #tpu.dot_dimension_numbers<[1], [0], [0], [1], [0, 0, 1, 1], [], []>} : vector<8x64xbf16>, vector<64x128xbf16>, vector<8x128xf32> -> vector<8x128xf32>
    %c0_3 = arith.constant 0 : index
    %c0_4 = arith.constant 0 : index
    %3 = vector.load %arg4[%c0_3, %c0_4] : memref<1x128xf32, #tpu.memory_space<vmem>>, vector<1x128xf32>
    %4 = vector.broadcast %3 : vector<1x128xf32> to vector<8x128xf32>
    %5 = arith.addf %2, %4 : vector<8x128xf32>
    %cst_5 = arith.constant 0.000000e+00 : f32
    %6 = vector.broadcast %cst_5 : f32 to vector<8x128xf32>
    %7 = arith.maximumf %5, %6 : vector<8x128xf32>
    %8 = arith.truncf %7 : vector<8x128xf32> to vector<8x128xbf16>
    %c0_6 = arith.constant 0 : index
    %c0_7 = arith.constant 0 : index
    %9 = vector.load %arg5[%c0_6, %c0_7] : memref<128x128xbf16, #tpu.memory_space<vmem>>, vector<128x128xbf16>
    %cst_8 = arith.constant dense<0.000000e+00> : vector<8x128xf32>
    %10 = tpu.matmul %8, %9, %cst_8 {dimension_numbers = #tpu.dot_dimension_numbers<[1], [0], [0], [1], [0, 0, 1, 1], [], []>} : vector<8x128xbf16>, vector<128x128xbf16>, vector<8x128xf32> -> vector<8x128xf32>
    %c0_9 = arith.constant 0 : index
    %c0_10 = arith.constant 0 : index
    %11 = vector.load %arg6[%c0_9, %c0_10] : memref<1x128xf32, #tpu.memory_space<vmem>>, vector<1x128xf32>
    %12 = vector.broadcast %11 : vector<1x128xf32> to vector<8x128xf32>
    %13 = arith.addf %10, %12 : vector<8x128xf32>
    %cst_11 = arith.constant 0.000000e+00 : f32
    %14 = vector.broadcast %cst_11 : f32 to vector<8x128xf32>
    %15 = arith.maximumf %13, %14 : vector<8x128xf32>
    %16 = arith.truncf %15 : vector<8x128xf32> to vector<8x128xbf16>
    %c0_12 = arith.constant 0 : index
    %c0_13 = arith.constant 0 : index
    %17 = vector.load %arg7[%c0_12, %c0_13] : memref<128x128xbf16, #tpu.memory_space<vmem>>, vector<128x128xbf16>
    %cst_14 = arith.constant dense<0.000000e+00> : vector<8x128xf32>
    %18 = tpu.matmul %16, %17, %cst_14 {dimension_numbers = #tpu.dot_dimension_numbers<[1], [0], [0], [1], [0, 0, 1, 1], [], []>} : vector<8x128xbf16>, vector<128x128xbf16>, vector<8x128xf32> -> vector<8x128xf32>
    %c0_15 = arith.constant 0 : index
    %c0_16 = arith.constant 0 : index
    %19 = vector.load %arg8[%c0_15, %c0_16] : memref<1x128xf32, #tpu.memory_space<vmem>>, vector<1x128xf32>
    %20 = vector.broadcast %19 : vector<1x128xf32> to vector<8x128xf32>
    %21 = arith.addf %18, %20 : vector<8x128xf32>
    %22 = vector.extract_strided_slice %21 {offsets = [0, 0], sizes = [8, 32], strides = [1, 1]} : vector<8x128xf32> to vector<8x32xf32>
    %23 = vector.extract_strided_slice %21 {offsets = [0, 32], sizes = [8, 32], strides = [1, 1]} : vector<8x128xf32> to vector<8x32xf32>
    %24 = vector.extract_strided_slice %21 {offsets = [0, 64], sizes = [8, 32], strides = [1, 1]} : vector<8x128xf32> to vector<8x32xf32>
    %25 = vector.extract_strided_slice %21 {offsets = [0, 96], sizes = [8, 32], strides = [1, 1]} : vector<8x128xf32> to vector<8x32xf32>
    %cst_17 = arith.constant 0.000000e+00 : f32
    %26 = vector.broadcast %cst_17 : f32 to vector<8x32xf32>
    %27 = arith.subf %26, %23 : vector<8x32xf32>
    %28 = math.exp %27 : vector<8x32xf32>
    %cst_18 = arith.constant 5.000000e-01 : f32
    %29 = vector.broadcast %cst_18 : f32 to vector<8x32xf32>
    %30 = arith.mulf %29, %25 : vector<8x32xf32>
    %31 = math.exp %30 : vector<8x32xf32>
    %32 = arith.subf %25, %23 : vector<8x32xf32>
    %cst_19 = arith.constant 1.000000e+00 : f32
    %33 = vector.broadcast %cst_19 : f32 to vector<8x32xf32>
    %34 = arith.addf %33, %32 : vector<8x32xf32>
    %35 = arith.subf %22, %24 : vector<8x32xf32>
    %36 = arith.mulf %35, %35 : vector<8x32xf32>
    %37 = arith.mulf %36, %28 : vector<8x32xf32>
    %38 = arith.subf %34, %37 : vector<8x32xf32>
    %39 = arith.mulf %31, %31 : vector<8x32xf32>
    %40 = arith.mulf %39, %28 : vector<8x32xf32>
    %41 = arith.subf %38, %40 : vector<8x32xf32>
    %cst_20 = arith.constant dense<0.000000e+00> : vector<8xf32>
    %42 = vector.multi_reduction <add>, %41, %cst_20 [1] : vector<8x32xf32> to vector<8xf32>
    %43 = vector.shape_cast %42 : vector<8xf32> to vector<8x1xf32>
    %cst_21 = arith.constant -5.000000e-01 : f32
    %44 = vector.broadcast %cst_21 : f32 to vector<8x1xf32>
    %45 = arith.mulf %44, %43 : vector<8x1xf32>
    %c0_22 = arith.constant 0 : index
    %c0_23 = arith.constant 0 : index
    %46 = vector.load %arg10[%c0_22, %c0_23] : memref<8x1xf32, #tpu.memory_space<vmem>>, vector<8x1xf32>
    tpu.vector_store %arg10[%c0_22, %c0_23], %45 {strides = array<i32>} : memref<8x1xf32, #tpu.memory_space<vmem>>, vector<8x1xf32>,
    %c0_24 = arith.constant 0 : index
    %c0_25 = arith.constant 0 : index
    %47 = vector.load %arg2[%c0_24, %c0_25] : memref<8x32xf32, #tpu.memory_space<vmem>>, vector<8x32xf32>
    %48 = arith.mulf %47, %31 : vector<8x32xf32>
    %49 = arith.addf %48, %24 : vector<8x32xf32>
    %c0_26 = arith.constant 0 : index
    %c0_27 = arith.constant 0 : index
    %50 = vector.load %arg9[%c0_26, %c0_27] : memref<8x32xf32, #tpu.memory_space<vmem>>, vector<8x32xf32>
    tpu.vector_store %arg9[%c0_26, %c0_27], %49 {strides = array<i32>} : memref<8x32xf32, #tpu.memory_space<vmem>>, vector<8x32xf32>,
    return
  }
  func.func @transform_0(%arg0: i32) -> (i32, i32) {
    %c0_i32 = arith.constant 0 : i32
    %c0_i32_0 = arith.constant 0 : i32
    return %arg0, %c0_i32 : i32, i32
  }
  func.func @transform_1(%arg0: i32) -> (i32, i32) {
    %c0_i32 = arith.constant 0 : i32
    %c0_i32_0 = arith.constant 0 : i32
    return %arg0, %c0_i32 : i32, i32
  }
  func.func @transform_2(%arg0: i32) -> (i32, i32) {
    %c0_i32 = arith.constant 0 : i32
    %c0_i32_0 = arith.constant 0 : i32
    %c0_i32_1 = arith.constant 0 : i32
    return %c0_i32, %c0_i32_0 : i32, i32
  }
  func.func @transform_3(%arg0: i32) -> (i32, i32) {
    %c0_i32 = arith.constant 0 : i32
    %c0_i32_0 = arith.constant 0 : i32
    %c0_i32_1 = arith.constant 0 : i32
    return %c0_i32, %c0_i32_0 : i32, i32
  }
  func.func @transform_4(%arg0: i32) -> (i32, i32) {
    %c0_i32 = arith.constant 0 : i32
    %c0_i32_0 = arith.constant 0 : i32
    %c0_i32_1 = arith.constant 0 : i32
    return %c0_i32, %c0_i32_0 : i32, i32
  }
  func.func @transform_5(%arg0: i32) -> (i32, i32) {
    %c0_i32 = arith.constant 0 : i32
    %c0_i32_0 = arith.constant 0 : i32
    %c0_i32_1 = arith.constant 0 : i32
    return %c0_i32, %c0_i32_0 : i32, i32
  }
  func.func @transform_6(%arg0: i32) -> (i32, i32) {
    %c0_i32 = arith.constant 0 : i32
    %c0_i32_0 = arith.constant 0 : i32
    %c0_i32_1 = arith.constant 0 : i32
    return %c0_i32, %c0_i32_0 : i32, i32
  }
  func.func @transform_7(%arg0: i32) -> (i32, i32) {
    %c0_i32 = arith.constant 0 : i32
    %c0_i32_0 = arith.constant 0 : i32
    %c0_i32_1 = arith.constant 0 : i32
    return %c0_i32, %c0_i32_0 : i32, i32
  }
  func.func @transform_8(%arg0: i32) -> (i32, i32) {
    %c0_i32 = arith.constant 0 : i32
    %c0_i32_0 = arith.constant 0 : i32
    return %arg0, %c0_i32 : i32, i32
  }
  func.func @transform_9(%arg0: i32) -> (i32, i32) {
    %c0_i32 = arith.constant 0 : i32
    %c0_i32_0 = arith.constant 0 : i32
    return %arg0, %c0_i32 : i32, i32
  }
}

</mosaic_0001>

<llo_original>
// kernel: tpu_custom_call.1
$region0: #{tpu_custom_call.1}
  #allocation0 [shape = 'u32[]', space=smem, size = 0x4, offset = 0x4, fixed_abs, tag = 'smem constant byte address 0x4 - core index']
  #allocation1 [shape = 'u32[144,128]{1,0:T(1,128)}', space=vmem, size = 0x12000, scoped, tag = 'internal scratch']
  %s0 = inlined_call_operand.hbm [shape: bf16[8,64], index: 0, kind: input, shape index: {}]
  %s1 = inlined_call_operand.hbm [shape: f32[8,32], index: 1, kind: input, shape index: {}]
  %s2 = inlined_call_operand.hbm [shape: bf16[64,128], index: 2, kind: input, shape index: {}]
  %s3 = inlined_call_operand.vmem [shape: f32[1,128], index: 3, kind: input, shape index: {}]
  %s4 = inlined_call_operand.hbm [shape: bf16[128,128], index: 4, kind: input, shape index: {}]
  %s5 = inlined_call_operand.vmem [shape: f32[1,128], index: 5, kind: input, shape index: {}]
  %s6 = inlined_call_operand.hbm [shape: bf16[128,128], index: 6, kind: input, shape index: {}]
  %s7 = inlined_call_operand.vmem [shape: f32[1,128], index: 7, kind: input, shape index: {}]
  %s8 = inlined_call_operand.hbm [shape: f32[8,32], index: 8, kind: output, shape index: {0}]
  %s9 = inlined_call_operand.vmem [shape: f32[8,1], index: 9, kind: output, shape index: {1}]
  %10 = xla_tuple %s8, %s9
  %s11 = sld [smem:[#allocation0]]
  $region70: #{tpu_custom_call.1} parent=0
    _
  %s13 = ssub.s32 1, %s11
  %s14 = scalar_select 0, %s13, %s11
  $region1: #{tpu_custom_call.1} parent=0
    #allocation2 [shape = 'u8[2048]{0}', space=vmem, size = 0x800, scoped, tag = 'input window, operand 0, single buffered']
    #allocation3 [shape = 's32[1]{0}', space=sflag, size = 0x4, scoped, tag = 'scoped memory for tpu_custom_call.1']
    #allocation4 [shape = 's32[1]{0}', space=sflag, size = 0x4, scoped, tag = 'scoped memory for tpu_custom_call.1']
    #allocation5 [shape = 'u8[4096]{0}', space=vmem, size = 0x1000, scoped, tag = 'input window, operand 1, single buffered']
    #allocation6 [shape = 's32[1]{0}', space=sflag, size = 0x4, scoped, tag = 'scoped memory for tpu_custom_call.1']
    #allocation7 [shape = 'u8[16384]{0}', space=vmem, size = 0x4000, scoped, tag = 'input window, operand 2, single buffered']
    #allocation8 [shape = 'u8[32768]{0}', space=vmem, size = 0x8000, scoped, tag = 'input window, operand 4, single buffered']
    #allocation9 [shape = 's32[1]{0}', space=sflag, size = 0x4, scoped, tag = 'scoped memory for tpu_custom_call.1']
    #allocation10 [shape = 'u8[32768]{0}', space=vmem, size = 0x8000, scoped, tag = 'input window, operand 6, single buffered']
    #allocation11 [shape = 'u8[4096]{0}', space=vmem, size = 0x1000, scoped, tag = 'output window, operand 0, single buffered']
    %15 = vsyncpa [#allocation3], 0
    %16 = vsyncpa [#allocation6], 0
    %17 = vsyncpa [#allocation9], 0
    %18 = vsyncpa [#allocation4], 0
    // Predicated region
    $region2: #{tpu_custom_call.1} parent=1 // pred_check
      _
    $region3: #{tpu_custom_call.1} parent=1 // pred_check_branch
      %20 = sbr.rel (0) target = $region5
    $region4: #{tpu_custom_call.1} parent=1 // pred_region
      %s22 = ssub.s32 64, 64
      %23 = vsyncadd [#allocation3], %s22
      %s25 = sshll.u32 [#allocation2], 4
      %s26 = int_to_ptr.vmem [resolvable:$true] %s25
      %28 = dma.hbm_to_vmem [thread:$0]  %s0, 64, %s26, [#allocation3]
    $region5: #{tpu_custom_call.1} parent=1 // pred_fallthru
      _
    // Predicated region
    $region6: #{tpu_custom_call.1} parent=1 // pred_check
      _
    $region7: #{tpu_custom_call.1} parent=1 // pred_check_branch
      %30 = sbr.rel (0) target = $region9
    $region8: #{tpu_custom_call.1} parent=1 // pred_region
      %s32 = ssub.s32 128, 128
      %33 = vsyncadd [#allocation6], %s32
      %s35 = sshll.u32 [#allocation5], 4
      %s36 = int_to_ptr.vmem [resolvable:$true] %s35
      %38 = dma.hbm_to_vmem [thread:$0]  %s1, 128, %s36, [#allocation6]
    $region9: #{tpu_custom_call.1} parent=1 // pred_fallthru
      _
    // Predicated region
    $region10: #{tpu_custom_call.1} parent=1 // pred_check
      _
    $region11: #{tpu_custom_call.1} parent=1 // pred_check_branch
      %40 = sbr.rel (0) target = $region13
    $region12: #{tpu_custom_call.1} parent=1 // pred_region
      %s42 = ssub.s32 512, 512
      %43 = vsyncadd [#allocation6], %s42
      %s44 = sshll.u32 [#allocation7], 4
      %s45 = int_to_ptr.vmem [resolvable:$true] %s44
      %50 = dma.hbm_to_vmem [thread:$0]  %s2, 512, %s45, [#allocation6], 64, 64, 4
    $region13: #{tpu_custom_call.1} parent=1 // pred_fallthru
      _
    // Predicated region
    $region14: #{tpu_custom_call.1} parent=1 // pred_check
      _
    $region15: #{tpu_custom_call.1} parent=1 // pred_check_branch
      %52 = sbr.rel (0) target = $region17
    $region16: #{tpu_custom_call.1} parent=1 // pred_region
      _
    $region17: #{tpu_custom_call.1} parent=1 // pred_fallthru
      _
    // Predicated region
    $region18: #{tpu_custom_call.1} parent=1 // pred_check
      _
    $region19: #{tpu_custom_call.1} parent=1 // pred_check_branch
      %54 = sbr.rel (0) target = $region21
    $region20: #{tpu_custom_call.1} parent=1 // pred_region
      %s56 = ssub.s32 1024, 1024
      %57 = vsyncadd [#allocation9], %s56
      %s58 = sshll.u32 [#allocation8], 4
      %s59 = int_to_ptr.vmem [resolvable:$true] %s58
      %64 = dma.hbm_to_vmem [thread:$0]  %s4, 1024, %s59, [#allocation9], 64, 64, 4
    $region21: #{tpu_custom_call.1} parent=1 // pred_fallthru
      _
    // Predicated region
    $region22: #{tpu_custom_call.1} parent=1 // pred_check
      _
    $region23: #{tpu_custom_call.1} parent=1 // pred_check_branch
      %66 = sbr.rel (0) target = $region25
    $region24: #{tpu_custom_call.1} parent=1 // pred_region
      _
    $region25: #{tpu_custom_call.1} parent=1 // pred_fallthru
      _
    // Predicated region
    $region26: #{tpu_custom_call.1} parent=1 // pred_check
      _
    $region27: #{tpu_custom_call.1} parent=1 // pred_check_branch
      %68 = sbr.rel (0) target = $region29
    $region28: #{tpu_custom_call.1} parent=1 // pred_region
      %s70 = ssub.s32 1024, 1024
      %71 = vsyncadd [#allocation9], %s70
      %s72 = sshll.u32 [#allocation10], 4
      %s73 = int_to_ptr.vmem [resolvable:$true] %s72
      %78 = dma.hbm_to_vmem [thread:$0]  %s6, 1024, %s73, [#allocation9], 64, 64, 4
    $region29: #{tpu_custom_call.1} parent=1 // pred_fallthru
      _
    // Predicated region
    $region30: #{tpu_custom_call.1} parent=1 // pred_check
      _
    $region31: #{tpu_custom_call.1} parent=1 // pred_check_branch
      %80 = sbr.rel (0) target = $region33
    $region32: #{tpu_custom_call.1} parent=1 // pred_region
      _
    $region33: #{tpu_custom_call.1} parent=1 // pred_fallthru
      _
    // Predicated region
    $region34: #{tpu_custom_call.1} parent=1 // pred_check
      _
    $region35: #{tpu_custom_call.1} parent=1 // pred_check_branch
      %82 = sbr.rel (0) target = $region37
    $region36: #{tpu_custom_call.1} parent=1 // pred_region
      %83 = dma.done [#allocation3], 64
    $region37: #{tpu_custom_call.1} parent=1 // pred_fallthru
      _
    // Predicated region
    $region38: #{tpu_custom_call.1} parent=1 // pred_check
      _
    $region39: #{tpu_custom_call.1} parent=1 // pred_check_branch
      %85 = sbr.rel (0) target = $region41
    $region40: #{tpu_custom_call.1} parent=1 // pred_region
      %86 = dma.done [#allocation6], 128
    $region41: #{tpu_custom_call.1} parent=1 // pred_fallthru
      _
    // Predicated region
    $region42: #{tpu_custom_call.1} parent=1 // pred_check
      _
    $region43: #{tpu_custom_call.1} parent=1 // pred_check_branch
      %88 = sbr.rel (0) target = $region45
    $region44: #{tpu_custom_call.1} parent=1 // pred_region
      %89 = dma.done [#allocation6], 512
    $region45: #{tpu_custom_call.1} parent=1 // pred_fallthru
      _
    // Predicated region
    $region46: #{tpu_custom_call.1} parent=1 // pred_check
      _
    $region47: #{tpu_custom_call.1} parent=1 // pred_check_branch
      %91 = sbr.rel (0) target = $region49
    $region48: #{tpu_custom_call.1} parent=1 // pred_region
      %92 = dma.done [#allocation9], 1024
    $region49: #{tpu_custom_call.1} parent=1 // pred_fallthru
      _
    // Predicated region
    $region50: #{tpu_custom_call.1} parent=1 // pred_check
      _
    $region51: #{tpu_custom_call.1} parent=1 // pred_check_branch
      %94 = sbr.rel (0) target = $region53
    $region52: #{tpu_custom_call.1} parent=1 // pred_region
      %95 = dma.done [#allocation9], 1024
    $region53: #{tpu_custom_call.1} parent=1 // pred_fallthru
      _
    %v97 = vld [vmem:[#allocation2] sm:$0xf]
    %v98 = vld [vmem:[#allocation7] sm:$0xf]
    %v99 = vld [vmem:[#allocation7 + $0x4] sm:$0xf]
    %v100 = vld [vmem:[#allocation7 + $0x8] sm:$0xf]
    %v101 = vld [vmem:[#allocation7 + $0xc] sm:$0xf]
    %v102 = vld [vmem:[#allocation7 + $0x10] sm:$0xf]
    %v103 = vld [vmem:[#allocation7 + $0x14] sm:$0xf]
    %v104 = vld [vmem:[#allocation7 + $0x18] sm:$0xf]
    %v105 = vld [vmem:[#allocation7 + $0x1c] sm:$0xf]
    %v106 = vld [vmem:[%s3] sm:$0x1]
    %v108 = vlaneseq
    %v109 = vshrl.u32 %v108, 7
    %v110 = vsub.s32 0, %v109
    %v111 = vrot.slane %v106, %v110
    %v121 = vunpack.c.l.b16 %v98
    %v122 = vunpack.c.l.b16 %v99
    %v123 = vunpack.c.l.b16 %v100
    %v124 = vunpack.c.l.b16 %v101
    %v125 = vunpack.c.l.b16 %v102
    %v126 = vunpack.c.l.b16 %v103
    %v127 = vunpack.c.l.b16 %v104
    %v128 = vunpack.c.l.b16 %v105
    %v129 = vpack.c.b16 %v122, %v121
    %v130 = vpack.c.b16 %v124, %v123
    %v131 = vpack.c.b16 %v126, %v125
    %v132 = vpack.c.b16 %v128, %v127
    %vm137 = vcmask 523264
    %v139 = vsel %vm137, %v97, 0
    %141 = vmatprep.subr.bf16.mxu0 0
    %142 = vmatpush1.bf16.msra.mxu0 0
    %143 = vmatprep.subr.bf16.mxu0 0
    %144 = vmatpush1.bf16.msra.mxu0 0
    %145 = vmatprep.subr.bf16.mxu0 0
    %146 = vmatpush1.bf16.msra.mxu0 0
    %147 = vmatprep.subr.bf16.mxu0 0
    %148 = vmatpush1.bf16.msra.mxu0 0
    %149 = vmatprep.subr.bf16.mxu0 0
    %150 = vmatpush1.bf16.msra.mxu0 %v132
    %151 = vmatprep.subr.bf16.mxu0 0
    %152 = vmatpush1.bf16.msra.mxu0 %v131
    %153 = vmatprep.subr.bf16.mxu0 0
    %154 = vmatpush1.bf16.msra.mxu0 %v130
    %155 = vmatprep.subr.bf16.mxu0 0
    %156 = vmatpush1.bf16.msra.mxu0 %v129
    %157 = vmatprep.subr.bf16.mxu0 0
    %158 = vmatpush2.bf16.msra.mxu0 0
    %159 = vmatprep.subr.bf16.mxu0 0
    %160 = vmatpush2.bf16.msra.mxu0 0
    %161 = vmatprep.subr.bf16.mxu0 0
    %162 = vmatpush2.bf16.msra.mxu0 0
    %163 = vmatprep.subr.bf16.mxu0 0
    %164 = vmatpush2.bf16.msra.mxu0 0
    %165 = vmatprep.subr.bf16.mxu0 0
    %166 = vmatpush2.bf16.msra.mxu0 0
    %167 = vmatprep.subr.bf16.mxu0 0
    %168 = vmatpush2.bf16.msra.mxu0 0
    %169 = vmatprep.subr.bf16.mxu0 0
    %170 = vmatpush2.bf16.msra.mxu0 0
    %171 = vmatprep.subr.bf16.mxu0 0
    %172 = vmatpush2.bf16.msra.mxu0 0
    %173 = vmatprep.mubr.bf16.mxu0 0
    %174 = vmatmul.mubr.bf16.gmra.mxu0 %v139
    %v175 = vpop.f32.mrf.mxu0
    %v176 = vadd.f32 %v111, %v175
    %v177 = vpop.f32.mrf.mxu0
    %v178 = vpop.f32.mrf.mxu0
    %v179 = vpop.f32.mrf.mxu0
    %180 = vdwg.mxu0
    %v181 = vmax.f32 %v176, 0.0
    %v182 = vpack.c.bf16 %v181, %v181
    %v183 = vld [vmem:[#allocation8] sm:$0xf]
    %v184 = vld [vmem:[#allocation8 + $0x4] sm:$0xf]
    %v185 = vld [vmem:[#allocation8 + $0x8] sm:$0xf]
    %v186 = vld [vmem:[#allocation8 + $0xc] sm:$0xf]
    %v187 = vld [vmem:[#allocation8 + $0x10] sm:$0xf]
    %v188 = vld [vmem:[#allocation8 + $0x14] sm:$0xf]
    %v189 = vld [vmem:[#allocation8 + $0x18] sm:$0xf]
    %v190 = vld [vmem:[#allocation8 + $0x1c] sm:$0xf]
    %v191 = vld [vmem:[#allocation8 + $0x20] sm:$0xf]
    %v192 = vld [vmem:[#allocation8 + $0x24] sm:$0xf]
    %v193 = vld [vmem:[#allocation8 + $0x28] sm:$0xf]
    %v194 = vld [vmem:[#allocation8 + $0x2c] sm:$0xf]
    %v195 = vld [vmem:[#allocation8 + $0x30] sm:$0xf]
    %v196 = vld [vmem:[#allocation8 + $0x34] sm:$0xf]
    %v197 = vld [vmem:[#allocation8 + $0x38] sm:$0xf]
    %v198 = vld [vmem:[#allocation8 + $0x3c] sm:$0xf]
    %v199 = vld [vmem:[%s5] sm:$0x1]
    %v201 = vlaneseq
    %v202 = vshrl.u32 %v201, 7
    %v203 = vsub.s32 0, %v202
    %v204 = vrot.slane %v199, %v203
    %v222 = vunpack.c.l.b16 %v183
    %v223 = vunpack.c.l.b16 %v184
    %v224 = vunpack.c.l.b16 %v185
    %v225 = vunpack.c.l.b16 %v186
    %v226 = vunpack.c.l.b16 %v187
    %v227 = vunpack.c.l.b16 %v188
    %v228 = vunpack.c.l.b16 %v189
    %v229 = vunpack.c.l.b16 %v190
    %v230 = vunpack.c.l.b16 %v191
    %v231 = vunpack.c.l.b16 %v192
    %v232 = vunpack.c.l.b16 %v193
    %v233 = vunpack.c.l.b16 %v194
    %v234 = vunpack.c.l.b16 %v195
    %v235 = vunpack.c.l.b16 %v196
    %v236 = vunpack.c.l.b16 %v197
    %v237 = vunpack.c.l.b16 %v198
    %v238 = vpack.c.b16 %v223, %v222
    %v239 = vpack.c.b16 %v225, %v224
    %v240 = vpack.c.b16 %v227, %v226
    %v241 = vpack.c.b16 %v229, %v228
    %v242 = vpack.c.b16 %v231, %v230
    %v243 = vpack.c.b16 %v233, %v232
    %v244 = vpack.c.b16 %v235, %v234
    %v245 = vpack.c.b16 %v237, %v236
    %254 = vmatprep.subr.bf16.mxu0 0
    %255 = vmatpush1.bf16.msra.mxu0 %v245
    %256 = vmatprep.subr.bf16.mxu0 0
    %257 = vmatpush1.bf16.msra.mxu0 %v244
    %258 = vmatprep.subr.bf16.mxu0 0
    %259 = vmatpush1.bf16.msra.mxu0 %v243
    %260 = vmatprep.subr.bf16.mxu0 0
    %261 = vmatpush1.bf16.msra.mxu0 %v242
    %262 = vmatprep.subr.bf16.mxu0 0
    %263 = vmatpush1.bf16.msra.mxu0 %v241
    %264 = vmatprep.subr.bf16.mxu0 0
    %265 = vmatpush1.bf16.msra.mxu0 %v240
    %266 = vmatprep.subr.bf16.mxu0 0
    %267 = vmatpush1.bf16.msra.mxu0 %v239
    %268 = vmatprep.subr.bf16.mxu0 0
    %269 = vmatpush1.bf16.msra.mxu0 %v238
    %270 = vmatprep.subr.bf16.mxu0 0
    %271 = vmatpush2.bf16.msra.mxu0 0
    %272 = vmatprep.subr.bf16.mxu0 0
    %273 = vmatpush2.bf16.msra.mxu0 0
    %274 = vmatprep.subr.bf16.mxu0 0
    %275 = vmatpush2.bf16.msra.mxu0 0
    %276 = vmatprep.subr.bf16.mxu0 0
    %277 = vmatpush2.bf16.msra.mxu0 0
    %278 = vmatprep.subr.bf16.mxu0 0
    %279 = vmatpush2.bf16.msra.mxu0 0
    %280 = vmatprep.subr.bf16.mxu0 0
    %281 = vmatpush2.bf16.msra.mxu0 0
    %282 = vmatprep.subr.bf16.mxu0 0
    %283 = vmatpush2.bf16.msra.mxu0 0
    %284 = vmatprep.subr.bf16.mxu0 0
    %285 = vmatpush2.bf16.msra.mxu0 0
    %286 = vmatprep.mubr.bf16.mxu0 0
    %287 = vmatmul.mubr.bf16.gmra.mxu0 %v182
    %v288 = vpop.f32.mrf.mxu0
    %v289 = vadd.f32 %v204, %v288
    %v290 = vpop.f32.mrf.mxu0
    %v291 = vpop.f32.mrf.mxu0
    %v292 = vpop.f32.mrf.mxu0
    %293 = vdwg.mxu0
    %v294 = vmax.f32 %v289, 0.0
    %v295 = vpack.c.bf16 %v294, %v294
    %v296 = vld [vmem:[#allocation10] sm:$0xf]
    %v297 = vld [vmem:[#allocation10 + $0x4] sm:$0xf]
    %v298 = vld [vmem:[#allocation10 + $0x8] sm:$0xf]
    %v299 = vld [vmem:[#allocation10 + $0xc] sm:$0xf]
    %v300 = vld [vmem:[#allocation10 + $0x10] sm:$0xf]
    %v301 = vld [vmem:[#allocation10 + $0x14] sm:$0xf]
    %v302 = vld [vmem:[#allocation10 + $0x18] sm:$0xf]
    %v303 = vld [vmem:[#allocation10 + $0x1c] sm:$0xf]
    %v304 = vld [vmem:[#allocation10 + $0x20] sm:$0xf]
    %v305 = vld [vmem:[#allocation10 + $0x24] sm:$0xf]
    %v306 = vld [vmem:[#allocation10 + $0x28] sm:$0xf]
    %v307 = vld [vmem:[#allocation10 + $0x2c] sm:$0xf]
    %v308 = vld [vmem:[#allocation10 + $0x30] sm:$0xf]
    %v309 = vld [vmem:[#allocation10 + $0x34] sm:$0xf]
    %v310 = vld [vmem:[#allocation10 + $0x38] sm:$0xf]
    %v311 = vld [vmem:[#allocation10 + $0x3c] sm:$0xf]
    %v312 = vld [vmem:[%s7] sm:$0x1]
    %v314 = vlaneseq
    %v315 = vshrl.u32 %v314, 7
    %v316 = vsub.s32 0, %v315
    %v317 = vrot.slane %v312, %v316
    %v335 = vunpack.c.l.b16 %v296
    %v336 = vunpack.c.l.b16 %v297
    %v337 = vunpack.c.l.b16 %v298
    %v338 = vunpack.c.l.b16 %v299
    %v339 = vunpack.c.l.b16 %v300
    %v340 = vunpack.c.l.b16 %v301
    %v341 = vunpack.c.l.b16 %v302
    %v342 = vunpack.c.l.b16 %v303
    %v343 = vunpack.c.l.b16 %v304
    %v344 = vunpack.c.l.b16 %v305
    %v345 = vunpack.c.l.b16 %v306
    %v346 = vunpack.c.l.b16 %v307
    %v347 = vunpack.c.l.b16 %v308
    %v348 = vunpack.c.l.b16 %v309
    %v349 = vunpack.c.l.b16 %v310
    %v350 = vunpack.c.l.b16 %v311
    %v351 = vpack.c.b16 %v336, %v335
    %v352 = vpack.c.b16 %v338, %v337
    %v353 = vpack.c.b16 %v340, %v339
    %v354 = vpack.c.b16 %v342, %v341
    %v355 = vpack.c.b16 %v344, %v343
    %v356 = vpack.c.b16 %v346, %v345
    %v357 = vpack.c.b16 %v348, %v347
    %v358 = vpack.c.b16 %v350, %v349
    %367 = vmatprep.subr.bf16.mxu0 0
    %368 = vmatpush1.bf16.msra.mxu0 %v358
    %369 = vmatprep.subr.bf16.mxu0 0
    %370 = vmatpush1.bf16.msra.mxu0 %v357
    %371 = vmatprep.subr.bf16.mxu0 0
    %372 = vmatpush1.bf16.msra.mxu0 %v356
    %373 = vmatprep.subr.bf16.mxu0 0
    %374 = vmatpush1.bf16.msra.mxu0 %v355
    %375 = vmatprep.subr.bf16.mxu0 0
    %376 = vmatpush1.bf16.msra.mxu0 %v354
    %377 = vmatprep.subr.bf16.mxu0 0
    %378 = vmatpush1.bf16.msra.mxu0 %v353
    %379 = vmatprep.subr.bf16.mxu0 0
    %380 = vmatpush1.bf16.msra.mxu0 %v352
    %381 = vmatprep.subr.bf16.mxu0 0
    %382 = vmatpush1.bf16.msra.mxu0 %v351
    %383 = vmatprep.subr.bf16.mxu0 0
    %384 = vmatpush2.bf16.msra.mxu0 0
    %385 = vmatprep.subr.bf16.mxu0 0
    %386 = vmatpush2.bf16.msra.mxu0 0
    %387 = vmatprep.subr.bf16.mxu0 0
    %388 = vmatpush2.bf16.msra.mxu0 0
    %389 = vmatprep.subr.bf16.mxu0 0
    %390 = vmatpush2.bf16.msra.mxu0 0
    %391 = vmatprep.subr.bf16.mxu0 0
    %392 = vmatpush2.bf16.msra.mxu0 0
    %393 = vmatprep.subr.bf16.mxu0 0
    %394 = vmatpush2.bf16.msra.mxu0 0
    %395 = vmatprep.subr.bf16.mxu0 0
    %396 = vmatpush2.bf16.msra.mxu0 0
    %397 = vmatprep.subr.bf16.mxu0 0
    %398 = vmatpush2.bf16.msra.mxu0 0
    %399 = vmatprep.mubr.bf16.mxu0 0
    %400 = vmatmul.mubr.bf16.gmra.mxu0 %v295
    %v401 = vpop.f32.mrf.mxu0
    %v402 = vadd.f32 %v317, %v401
    %v403 = vpop.f32.mrf.mxu0
    %v404 = vpop.f32.mrf.mxu0
    %v405 = vpop.f32.mrf.mxu0
    %406 = vdwg.mxu0
    %v407 = vsub.f32 0.0, %v402
    %v408 = vmul.f32 %v407, 1.442695
    %v409 = vpow.pop %v408
    %v410 = vmul.f32 %v402, 0.5
    %v411 = vmul.f32 %v410, 1.442695
    %v412 = vpow.pop %v411
    %414 = vrot.lane.b32.xlu0 %v402, 64
    %v415 = vpop.permute.xlu0 %414
    %v417 = vsub.f32 %v402, %v415
    %v418 = vadd.f32 %v417, 1.0
    %v419 = vmul.f32 %v417, %v417
    %421 = vrot.lane.b32.xlu0 %v409, 96
    %v422 = vpop.permute.xlu0 %421
    %v424 = vmul.f32 %v419, %v422
    %426 = vrot.lane.b32.xlu0 %v424, 96
    %v427 = vpop.permute.xlu0 %426
    %v429 = vsub.f32 %v418, %v427
    %v430 = vmul.f32 %v412, %v412
    %431 = vrot.lane.b32.xlu0 %v409, 64
    %v432 = vpop.permute.xlu0 %431
    %v434 = vmul.f32 %v430, %v432
    %v435 = vsub.f32 %v429, %v434
    %437 = vrot.lane.b32.xlu0 %v435, 32
    %v438 = vpop.permute.xlu0 %437
    %vm440 = vcmask 261120
    %v441 = vsel %vm440, %v438, 0.0
    %442 = vadd.xlane.f32.xlu0 %v441
    %v443 = vpop.xlane.xlu0 %442
    %v444 = vmul.f32 %v443, -0.5
    %vm445 = vcmask 7168
    %446 = vst.msk [vmem:[%s9] sm:$0xff] %vm445, %v444
    %v447 = vld [vmem:[#allocation5] sm:$0xff]
    %449 = vrot.lane.b32.xlu0 %v412, 32
    %v450 = vpop.permute.xlu0 %449
    %v452 = vmul.f32 %v447, %v450
    %v453 = vadd.f32 %v452, %v415
    %454 = vst.msk [vmem:[#allocation11] sm:$0xff] %vm440, %v453
    // Predicated region
    $region54: #{tpu_custom_call.1} parent=1 // pred_check
      _
    $region55: #{tpu_custom_call.1} parent=1 // pred_check_branch
      %456 = sbr.rel (0) target = $region57
    $region56: #{tpu_custom_call.1} parent=1 // pred_region
      %s458 = ssub.s32 128, 128
      %459 = vsyncadd [#allocation4], %s458
      %s461 = sshll.u32 [#allocation11], 4
      %s462 = int_to_ptr.vmem [resolvable:$true] %s461
      %464 = dma.vmem_to_hbm [thread:$0]  %s462, 128, %s8, [#allocation4]
    $region57: #{tpu_custom_call.1} parent=1 // pred_fallthru
      _
    // Predicated region
    $region58: #{tpu_custom_call.1} parent=1 // pred_check
      _
    $region59: #{tpu_custom_call.1} parent=1 // pred_check_branch
      %466 = sbr.rel (0) target = $region61
    $region60: #{tpu_custom_call.1} parent=1 // pred_region
      _
    $region61: #{tpu_custom_call.1} parent=1 // pred_fallthru
      _
    // Predicated region
    $region62: #{tpu_custom_call.1} parent=1 // pred_check
      _
    $region63: #{tpu_custom_call.1} parent=1 // pred_check_branch
      %468 = sbr.rel (0) target = $region65
    $region64: #{tpu_custom_call.1} parent=1 // pred_region
      %469 = dma.done [#allocation4], 128
    $region65: #{tpu_custom_call.1} parent=1 // pred_fallthru
      _
    // Predicated region
    $region66: #{tpu_custom_call.1} parent=1 // pred_check
      _
    $region67: #{tpu_custom_call.1} parent=1 // pred_check_branch
      %471 = sbr.rel (0) target = $region69
    $region68: #{tpu_custom_call.1} parent=1 // pred_region
      _
    $region69: #{tpu_custom_call.1} parent=1 // pred_fallthru
      _
    %472 = vsyncpa [#allocation3], 1
    %473 = vsyncpa [#allocation6], 1
    %474 = vsyncpa [#allocation9], 1
    %475 = vsyncpa [#allocation4], 1

</llo_original>
